<compile_context>
chip_gen: v6e
topology: v6e:2x2x1
jax: 0.10.0
libtpu: 0.0.40
codegen_flags: <defaults>
</compile_context>

<pallas_src>
import functools

import jax
import jax.numpy as jnp
from jax.experimental import pallas as pl
from jax.experimental.pallas import tpu as pltpu


def _round_up(x, m):
    return ((x + m - 1) // m) * m


def _highway_kernel(c_ref, w_ref, ac_ref, aw_ref, b_ref, o_ref, *, dp):
    # c_ref: (tm, char_dim), w_ref: (tm, word_dim)
    # ac_ref: (char_dim, 3*dp) = [W1_c | W2_c | E_c]   (resident)
    # aw_ref: (word_dim, 3*dp) = [W1_w | W2_w | E_w]   (resident)
    # b_ref : (1, 3*dp)        = [b1 | b2 | 0]
    c = c_ref[...]
    w = w_ref[...]
    y = (jnp.dot(c, ac_ref[...], preferred_element_type=jnp.float32)
         + jnp.dot(w, aw_ref[...], preferred_element_type=jnp.float32)
         + b_ref[...])
    h = y[:, 0:dp]            # Dense1 pre-activation (padded lanes are 0)
    g = y[:, dp:2 * dp]       # transform pre-activation
    x = y[:, 2 * dp:3 * dp]   # concatenated input in padded layout (exact)
    t = jax.nn.sigmoid(g)
    out = jnp.maximum(h, 0.0)
    o_ref[...] = (out * t + (1.0 - t) * x).astype(o_ref.dtype)


def highway_pallas(word, char, w1, b1, w2, b2, *, tm=256):
    """word: (B,S,word_dim), char: (B,S,char_dim) -> (B,S,D), D = word_dim + char_dim."""
    B, S, wd = word.shape
    _, _, cd = char.shape
    D = wd + cd
    Dp = _round_up(D, 128)            # lane-dense output width
    M = B * S
    f32 = jnp.float32

    c2 = char.reshape(M, cd)
    w2d = word.reshape(M, wd)

    # Build stacked, padded weights once (plain JAX, O(D^2) << kernel work).
    def pad_cols(m):
        return jnp.pad(m.astype(f32), ((0, 0), (0, Dp - D)))

    ec = jnp.eye(cd, Dp, dtype=f32)            # char -> columns [0, cd)
    ew = jnp.eye(wd, Dp, k=cd, dtype=f32)      # word -> columns [cd, D)
    ac = jnp.concatenate([pad_cols(w1[:cd]), pad_cols(w2[:cd]), ec], axis=1)  # (cd, 3*Dp)
    aw = jnp.concatenate([pad_cols(w1[cd:]), pad_cols(w2[cd:]), ew], axis=1)  # (wd, 3*Dp)
    bias = jnp.concatenate(
        [jnp.pad(b1.astype(f32), (0, Dp - D)),
         jnp.pad(b2.astype(f32), (0, Dp - D)),
         jnp.zeros((Dp,), f32)]).reshape(1, 3 * Dp)

    # Row tile: large (sweepable), multiple of 8, clamped to the problem size.
    tm_eff = min(tm, _round_up(M, 8))
    tm_eff = max(8, (tm_eff // 8) * 8)
    grid = (pl.cdiv(M, tm_eff),)

    cost = pl.CostEstimate(
        flops=2 * M * D * 3 * Dp,
        transcendentals=M * Dp,
        bytes_accessed=4 * (M * D + M * Dp + D * 3 * Dp + 3 * Dp),
    )

    # VMEM estimate: double-buffered row tiles (char/word/out) + resident weights/bias.
    vmem_need = 4 * (2 * tm_eff * (cd + wd) + 2 * tm_eff * Dp + (D + 1) * 3 * Dp)
    cp_kwargs = dict(dimension_semantics=("parallel",))
    if int(1.5 * vmem_need) > (32 << 20):
        cp_kwargs["vmem_limit_bytes"] = min(96 << 20, int(1.5 * vmem_need))

    def _call(single_buffer_weights):
        pm = {"pipeline_mode": pl.Buffered(1)} if single_buffer_weights else {}

        def wspec(shape):  # grid-invariant (resident) block
            return pl.BlockSpec(shape, lambda i: (0, 0), **pm)

        return pl.pallas_call(
            functools.partial(_highway_kernel, dp=Dp),
            out_shape=jax.ShapeDtypeStruct((M, Dp), word.dtype),
            grid_spec=pltpu.PrefetchScalarGridSpec(
                num_scalar_prefetch=0,
                grid=grid,
                in_specs=[
                    pl.BlockSpec((tm_eff, cd), lambda i: (i, 0)),   # char rows
                    pl.BlockSpec((tm_eff, wd), lambda i: (i, 0)),   # word rows
                    wspec((cd, 3 * Dp)),                            # Ac (resident)
                    wspec((wd, 3 * Dp)),                            # Aw (resident)
                    wspec((1, 3 * Dp)),                             # bias (resident)
                ],
                out_specs=pl.BlockSpec((tm_eff, Dp), lambda i: (i, 0)),
            ),
            compiler_params=pltpu.CompilerParams(**cp_kwargs),
            cost_estimate=cost,
        )(c2, w2d, ac, aw, bias)

    try:
        out2 = _call(True)    # single-buffer the constant weight blocks (saves VMEM)
    except Exception:         # fallback if Buffered(1) is unsupported in this version
        out2 = _call(False)

    if Dp != D:
        out2 = out2[:, :D]
    return out2.reshape(B, S, D)


def highway_ref(word, char, w1, b1, w2, b2):
    x = jnp.concatenate([char, word], axis=2)
    out = jax.nn.relu(x @ w1 + b1)
    t = jax.nn.sigmoid(x @ w2 + b2)
    return out * t + (1.0 - t) * x


if __name__ == "__main__":
    B, S = 2, 8
    word_dim, char_dim = 16, 16
    D = word_dim + char_dim

    key = jax.random.PRNGKey(0)
    k_word, k_char, k_w1, k_b1, k_w2, k_b2 = jax.random.split(key, 6)

    word = jax.random.normal(k_word, (B, S, word_dim), dtype=jnp.float32)
    char = jax.random.normal(k_char, (B, S, char_dim), dtype=jnp.float32)

    # nn.Linear-style uniform(-1/sqrt(D), 1/sqrt(D)) init, stored (D_in, D_out).
    bound = 1.0 / jnp.sqrt(jnp.float32(D))
    w1 = jax.random.uniform(k_w1, (D, D), jnp.float32, -bound, bound)
    b1 = jax.random.uniform(k_b1, (D,), jnp.float32, -bound, bound)
    w2 = jax.random.uniform(k_w2, (D, D), jnp.float32, -bound, bound)
    b2 = jax.random.uniform(k_b2, (D,), jnp.float32, -bound, bound)

    out = highway_pallas(word, char, w1, b1, w2, b2)
    out = jax.block_until_ready(out)

    ref = highway_ref(word, char, w1, b1, w2, b2)
    assert out.shape == (B, S, D)
    assert jnp.allclose(out, ref, atol=1e-5, rtol=1e-5), "mismatch vs reference"
    print("KERNEL_OK")
</pallas_src>

<mosaic_0001>
module attributes {stable_mosaic.version = 11 : i64} {
  func.func @_highway_kernel(%arg0: i32, %arg1: memref<16x16xf32, #tpu.memory_space<vmem>>, %arg2: memref<16x16xf32, #tpu.memory_space<vmem>>, %arg3: memref<16x384xf32, #tpu.memory_space<vmem>>, %arg4: memref<16x384xf32, #tpu.memory_space<vmem>>, %arg5: memref<1x384xf32, #tpu.memory_space<vmem>>, %arg6: memref<16x128xf32, #tpu.memory_space<vmem>>) attributes {dimension_semantics = [#tpu.dimension_semantics<parallel>], iteration_bounds = array<i64: 1>, scalar_prefetch = 0 : i64, scratch_operands = 0 : i64, tpu.core_type = #tpu.core_type<tc>, window_params = [{transform_indices = @transform_0, window_bounds = array<i64: 16, 16>}, {transform_indices = @transform_1, window_bounds = array<i64: 16, 16>}, {pipeline_mode = #tpu.pipeline_mode<synchronous>, transform_indices = @transform_2, window_bounds = array<i64: 16, 384>}, {pipeline_mode = #tpu.pipeline_mode<synchronous>, transform_indices = @transform_3, window_bounds = array<i64: 16, 384>}, {pipeline_mode = #tpu.pipeline_mode<synchronous>, transform_indices = @transform_4, window_bounds = array<i64: 1, 384>}, {transform_indices = @transform_5, window_bounds = array<i64: 16, 128>}]} {
    %c0 = arith.constant 0 : index
    %c0_0 = arith.constant 0 : index
    %0 = vector.load %arg1[%c0, %c0_0] : memref<16x16xf32, #tpu.memory_space<vmem>>, vector<16x16xf32>
    %c0_1 = arith.constant 0 : index
    %c0_2 = arith.constant 0 : index
    %1 = vector.load %arg2[%c0_1, %c0_2] : memref<16x16xf32, #tpu.memory_space<vmem>>, vector<16x16xf32>
    %c0_3 = arith.constant 0 : index
    %c0_4 = arith.constant 0 : index
    %2 = vector.load %arg3[%c0_3, %c0_4] : memref<16x384xf32, #tpu.memory_space<vmem>>, vector<16x384xf32>
    %cst = arith.constant dense<0.000000e+00> : vector<16x384xf32>
    %3 = tpu.matmul %0, %2, %cst {dimension_numbers = #tpu.dot_dimension_numbers<[1], [0], [0], [1], [0, 0, 1, 1], [], []>} : vector<16x16xf32>, vector<16x384xf32>, vector<16x384xf32> -> vector<16x384xf32>
    %c0_5 = arith.constant 0 : index
    %c0_6 = arith.constant 0 : index
    %4 = vector.load %arg4[%c0_5, %c0_6] : memref<16x384xf32, #tpu.memory_space<vmem>>, vector<16x384xf32>
    %cst_7 = arith.constant dense<0.000000e+00> : vector<16x384xf32>
    %5 = tpu.matmul %1, %4, %cst_7 {dimension_numbers = #tpu.dot_dimension_numbers<[1], [0], [0], [1], [0, 0, 1, 1], [], []>} : vector<16x16xf32>, vector<16x384xf32>, vector<16x384xf32> -> vector<16x384xf32>
    %6 = arith.addf %3, %5 : vector<16x384xf32>
    %c0_8 = arith.constant 0 : index
    %c0_9 = arith.constant 0 : index
    %7 = vector.load %arg5[%c0_8, %c0_9] : memref<1x384xf32, #tpu.memory_space<vmem>>, vector<1x384xf32>
    %8 = vector.broadcast %7 : vector<1x384xf32> to vector<16x384xf32>
    %9 = arith.addf %6, %8 : vector<16x384xf32>
    %10 = vector.extract_strided_slice %9 {offsets = [0, 0], sizes = [16, 128], strides = [1, 1]} : vector<16x384xf32> to vector<16x128xf32>
    %11 = vector.extract_strided_slice %9 {offsets = [0, 128], sizes = [16, 128], strides = [1, 1]} : vector<16x384xf32> to vector<16x128xf32>
    %12 = vector.extract_strided_slice %9 {offsets = [0, 256], sizes = [16, 128], strides = [1, 1]} : vector<16x384xf32> to vector<16x128xf32>
    %13 = arith.negf %11 : vector<16x128xf32>
    %14 = math.exp %13 : vector<16x128xf32>
    %cst_10 = arith.constant 1.000000e+00 : f32
    %15 = vector.broadcast %cst_10 : f32 to vector<16x128xf32>
    %16 = arith.addf %15, %14 : vector<16x128xf32>
    %17 = arith.divf %15, %16 : vector<16x128xf32>
    %cst_11 = arith.constant 0.000000e+00 : f32
    %18 = vector.broadcast %cst_11 : f32 to vector<16x128xf32>
    %19 = arith.maximumf %10, %18 : vector<16x128xf32>
    %20 = arith.mulf %19, %17 : vector<16x128xf32>
    %cst_12 = arith.constant 1.000000e+00 : f32
    %21 = vector.broadcast %cst_12 : f32 to vector<16x128xf32>
    %22 = arith.subf %21, %17 : vector<16x128xf32>
    %23 = arith.mulf %22, %12 : vector<16x128xf32>
    %24 = arith.addf %20, %23 : vector<16x128xf32>
    %c0_13 = arith.constant 0 : index
    %c0_14 = arith.constant 0 : index
    %25 = vector.load %arg6[%c0_13, %c0_14] : memref<16x128xf32, #tpu.memory_space<vmem>>, vector<16x128xf32>
    tpu.vector_store %arg6[%c0_13, %c0_14], %24 {strides = array<i32>} : memref<16x128xf32, #tpu.memory_space<vmem>>, vector<16x128xf32>,
    return
  }
  func.func @transform_0(%arg0: i32) -> (i32, i32) {
    %c0_i32 = arith.constant 0 : i32
    %c0_i32_0 = arith.constant 0 : i32
    return %arg0, %c0_i32 : i32, i32
  }
  func.func @transform_1(%arg0: i32) -> (i32, i32) {
    %c0_i32 = arith.constant 0 : i32
    %c0_i32_0 = arith.constant 0 : i32
    return %arg0, %c0_i32 : i32, i32
  }
  func.func @transform_2(%arg0: i32) -> (i32, i32) {
    %c0_i32 = arith.constant 0 : i32
    %c0_i32_0 = arith.constant 0 : i32
    %c0_i32_1 = arith.constant 0 : i32
    return %c0_i32, %c0_i32_0 : i32, i32
  }
  func.func @transform_3(%arg0: i32) -> (i32, i32) {
    %c0_i32 = arith.constant 0 : i32
    %c0_i32_0 = arith.constant 0 : i32
    %c0_i32_1 = arith.constant 0 : i32
    return %c0_i32, %c0_i32_0 : i32, i32
  }
  func.func @transform_4(%arg0: i32) -> (i32, i32) {
    %c0_i32 = arith.constant 0 : i32
    %c0_i32_0 = arith.constant 0 : i32
    %c0_i32_1 = arith.constant 0 : i32
    return %c0_i32, %c0_i32_0 : i32, i32
  }
  func.func @transform_5(%arg0: i32) -> (i32, i32) {
    %c0_i32 = arith.constant 0 : i32
    %c0_i32_0 = arith.constant 0 : i32
    return %arg0, %c0_i32 : i32, i32
  }
}

module attributes {stable_mosaic.version = 11 : i64} {
  func.func @_highway_kernel(%arg0: i32, %arg1: memref<16x16xf32, #tpu.memory_space<vmem>>, %arg2: memref<16x16xf32, #tpu.memory_space<vmem>>, %arg3: memref<16x384xf32, #tpu.memory_space<vmem>>, %arg4: memref<16x384xf32, #tpu.memory_space<vmem>>, %arg5: memref<1x384xf32, #tpu.memory_space<vmem>>, %arg6: memref<16x128xf32, #tpu.memory_space<vmem>>) attributes {dimension_semantics = [#tpu.dimension_semantics<parallel>], iteration_bounds = array<i64: 1>, scalar_prefetch = 0 : i64, scratch_operands = 0 : i64, tpu.core_type = #tpu.core_type<tc>, window_params = [{transform_indices = @transform_0, window_bounds = array<i64: 16, 16>}, {transform_indices = @transform_1, window_bounds = array<i64: 16, 16>}, {pipeline_mode = #tpu.pipeline_mode<synchronous>, transform_indices = @transform_2, window_bounds = array<i64: 16, 384>}, {pipeline_mode = #tpu.pipeline_mode<synchronous>, transform_indices = @transform_3, window_bounds = array<i64: 16, 384>}, {pipeline_mode = #tpu.pipeline_mode<synchronous>, transform_indices = @transform_4, window_bounds = array<i64: 1, 384>}, {transform_indices = @transform_5, window_bounds = array<i64: 16, 128>}]} {
    %c0 = arith.constant 0 : index
    %c0_0 = arith.constant 0 : index
    %0 = vector.load %arg1[%c0, %c0_0] : memref<16x16xf32, #tpu.memory_space<vmem>>, vector<16x16xf32>
    %c0_1 = arith.constant 0 : index
    %c0_2 = arith.constant 0 : index
    %1 = vector.load %arg2[%c0_1, %c0_2] : memref<16x16xf32, #tpu.memory_space<vmem>>, vector<16x16xf32>
    %c0_3 = arith.constant 0 : index
    %c0_4 = arith.constant 0 : index
    %2 = vector.load %arg3[%c0_3, %c0_4] : memref<16x384xf32, #tpu.memory_space<vmem>>, vector<16x384xf32>
    %cst = arith.constant dense<0.000000e+00> : vector<16x384xf32>
    %3 = tpu.matmul %0, %2, %cst {dimension_numbers = #tpu.dot_dimension_numbers<[1], [0], [0], [1], [0, 0, 1, 1], [], []>} : vector<16x16xf32>, vector<16x384xf32>, vector<16x384xf32> -> vector<16x384xf32>
    %c0_5 = arith.constant 0 : index
    %c0_6 = arith.constant 0 : index
    %4 = vector.load %arg4[%c0_5, %c0_6] : memref<16x384xf32, #tpu.memory_space<vmem>>, vector<16x384xf32>
    %cst_7 = arith.constant dense<0.000000e+00> : vector<16x384xf32>
    %5 = tpu.matmul %1, %4, %cst_7 {dimension_numbers = #tpu.dot_dimension_numbers<[1], [0], [0], [1], [0, 0, 1, 1], [], []>} : vector<16x16xf32>, vector<16x384xf32>, vector<16x384xf32> -> vector<16x384xf32>
    %6 = arith.addf %3, %5 : vector<16x384xf32>
    %c0_8 = arith.constant 0 : index
    %c0_9 = arith.constant 0 : index
    %7 = vector.load %arg5[%c0_8, %c0_9] : memref<1x384xf32, #tpu.memory_space<vmem>>, vector<1x384xf32>
    %8 = vector.broadcast %7 : vector<1x384xf32> to vector<16x384xf32>
    %9 = arith.addf %6, %8 : vector<16x384xf32>
    %10 = vector.extract_strided_slice %9 {offsets = [0, 0], sizes = [16, 128], strides = [1, 1]} : vector<16x384xf32> to vector<16x128xf32>
    %11 = vector.extract_strided_slice %9 {offsets = [0, 128], sizes = [16, 128], strides = [1, 1]} : vector<16x384xf32> to vector<16x128xf32>
    %12 = vector.extract_strided_slice %9 {offsets = [0, 256], sizes = [16, 128], strides = [1, 1]} : vector<16x384xf32> to vector<16x128xf32>
    %13 = arith.negf %11 : vector<16x128xf32>
    %14 = math.exp %13 : vector<16x128xf32>
    %cst_10 = arith.constant 1.000000e+00 : f32
    %15 = vector.broadcast %cst_10 : f32 to vector<16x128xf32>
    %16 = arith.addf %15, %14 : vector<16x128xf32>
    %17 = arith.divf %15, %16 : vector<16x128xf32>
    %cst_11 = arith.constant 0.000000e+00 : f32
    %18 = vector.broadcast %cst_11 : f32 to vector<16x128xf32>
    %19 = arith.maximumf %10, %18 : vector<16x128xf32>
    %20 = arith.mulf %19, %17 : vector<16x128xf32>
    %cst_12 = arith.constant 1.000000e+00 : f32
    %21 = vector.broadcast %cst_12 : f32 to vector<16x128xf32>
    %22 = arith.subf %21, %17 : vector<16x128xf32>
    %23 = arith.mulf %22, %12 : vector<16x128xf32>
    %24 = arith.addf %20, %23 : vector<16x128xf32>
    %c0_13 = arith.constant 0 : index
    %c0_14 = arith.constant 0 : index
    %25 = vector.load %arg6[%c0_13, %c0_14] : memref<16x128xf32, #tpu.memory_space<vmem>>, vector<16x128xf32>
    tpu.vector_store %arg6[%c0_13, %c0_14], %24 {strides = array<i32>} : memref<16x128xf32, #tpu.memory_space<vmem>>, vector<16x128xf32>,
    return
  }
  func.func @transform_0(%arg0: i32) -> (i32, i32) {
    %c0_i32 = arith.constant 0 : i32
    %c0_i32_0 = arith.constant 0 : i32
    return %arg0, %c0_i32 : i32, i32
  }
  func.func @transform_1(%arg0: i32) -> (i32, i32) {
    %c0_i32 = arith.constant 0 : i32
    %c0_i32_0 = arith.constant 0 : i32
    return %arg0, %c0_i32 : i32, i32
  }
  func.func @transform_2(%arg0: i32) -> (i32, i32) {
    %c0_i32 = arith.constant 0 : i32
    %c0_i32_0 = arith.constant 0 : i32
    %c0_i32_1 = arith.constant 0 : i32
    return %c0_i32, %c0_i32_0 : i32, i32
  }
  func.func @transform_3(%arg0: i32) -> (i32, i32) {
    %c0_i32 = arith.constant 0 : i32
    %c0_i32_0 = arith.constant 0 : i32
    %c0_i32_1 = arith.constant 0 : i32
    return %c0_i32, %c0_i32_0 : i32, i32
  }
  func.func @transform_4(%arg0: i32) -> (i32, i32) {
    %c0_i32 = arith.constant 0 : i32
    %c0_i32_0 = arith.constant 0 : i32
    %c0_i32_1 = arith.constant 0 : i32
    return %c0_i32, %c0_i32_0 : i32, i32
  }
  func.func @transform_5(%arg0: i32) -> (i32, i32) {
    %c0_i32 = arith.constant 0 : i32
    %c0_i32_0 = arith.constant 0 : i32
    return %arg0, %c0_i32 : i32, i32
  }
}

</mosaic_0001>

<llo_original>
// kernel: tpu_custom_call.1
$region0: #{tpu_custom_call.1}
  #allocation0 [shape = 'u32[]', space=smem, size = 0x4, offset = 0x4, fixed_abs, tag = 'smem constant byte address 0x4 - core index']
  #allocation1 [shape = 'u32[144,128]{1,0:T(1,128)}', space=vmem, size = 0x12000, scoped, tag = 'internal scratch']
  %s0 = inlined_call_operand.hbm [shape: f32[16,16], index: 0, kind: input, shape index: {}]
  %s1 = inlined_call_operand.hbm [shape: f32[16,16], index: 1, kind: input, shape index: {}]
  %s2 = inlined_call_operand.hbm [shape: f32[16,384], index: 2, kind: input, shape index: {}]
  %s3 = inlined_call_operand.hbm [shape: f32[16,384], index: 3, kind: input, shape index: {}]
  %s4 = inlined_call_operand.vmem [shape: f32[1,384], index: 4, kind: input, shape index: {}]
  %s5 = inlined_call_operand.hbm [shape: f32[16,128], index: 5, kind: output, shape index: {}]
  %s6 = sld [smem:[#allocation0]]
  $region46: #{tpu_custom_call.1} parent=0
    _
  %s8 = ssub.s32 1, %s6
  %s9 = scalar_select 0, %s8, %s6
  $region1: #{tpu_custom_call.1} parent=0
    #allocation2 [shape = 'u8[8192]{0}', space=vmem, size = 0x2000, scoped, tag = 'input window, operand 0, single buffered']
    #allocation3 [shape = 's32[1]{0}', space=sflag, size = 0x4, scoped, tag = 'scoped memory for tpu_custom_call.1']
    #allocation4 [shape = 's32[1]{0}', space=sflag, size = 0x4, scoped, tag = 'scoped memory for tpu_custom_call.1']
    #allocation5 [shape = 'u8[8192]{0}', space=vmem, size = 0x2000, scoped, tag = 'input window, operand 1, single buffered']
    #allocation6 [shape = 's32[1]{0}', space=sflag, size = 0x4, scoped, tag = 'scoped memory for tpu_custom_call.1']
    #allocation7 [shape = 'u8[24576]{0}', space=vmem, size = 0x6000, scoped, tag = 'input window, operand 2, single buffered']
    #allocation8 [shape = 'u8[24576]{0}', space=vmem, size = 0x6000, scoped, tag = 'input window, operand 3, single buffered']
    #allocation9 [shape = 's32[1]{0}', space=sflag, size = 0x4, scoped, tag = 'scoped memory for tpu_custom_call.1']
    #allocation10 [shape = 'u8[8192]{0}', space=vmem, size = 0x2000, scoped, tag = 'output window, operand 0, single buffered']
    %10 = vsyncpa [#allocation3], 0
    %11 = vsyncpa [#allocation6], 0
    %12 = vsyncpa [#allocation9], 0
    %13 = vsyncpa [#allocation4], 0
    // Predicated region
    $region2: #{tpu_custom_call.1} parent=1 // pred_check
      _
    $region3: #{tpu_custom_call.1} parent=1 // pred_check_branch
      %15 = sbr.rel (0) target = $region5
    $region4: #{tpu_custom_call.1} parent=1 // pred_region
      %s17 = ssub.s32 256, 256
      %18 = vsyncadd [#allocation3], %s17
      %s19 = sshll.u32 [#allocation2], 4
      %s20 = int_to_ptr.vmem [resolvable:$true] %s19
      %25 = dma.hbm_to_vmem [thread:$0]  %s0, 256, %s20, [#allocation3], 128, 128, 8
    $region5: #{tpu_custom_call.1} parent=1 // pred_fallthru
      _
    // Predicated region
    $region6: #{tpu_custom_call.1} parent=1 // pred_check
      _
    $region7: #{tpu_custom_call.1} parent=1 // pred_check_branch
      %27 = sbr.rel (0) target = $region9
    $region8: #{tpu_custom_call.1} parent=1 // pred_region
      %s29 = ssub.s32 256, 256
      %30 = vsyncadd [#allocation6], %s29
      %s31 = sshll.u32 [#allocation5], 4
      %s32 = int_to_ptr.vmem [resolvable:$true] %s31
      %37 = dma.hbm_to_vmem [thread:$0]  %s1, 256, %s32, [#allocation6], 128, 128, 8
    $region9: #{tpu_custom_call.1} parent=1 // pred_fallthru
      _
    // Predicated region
    $region10: #{tpu_custom_call.1} parent=1 // pred_check
      _
    $region11: #{tpu_custom_call.1} parent=1 // pred_check_branch
      %39 = sbr.rel (0) target = $region13
    $region12: #{tpu_custom_call.1} parent=1 // pred_region
      %s41 = ssub.s32 768, 768
      %42 = vsyncadd [#allocation6], %s41
      %s43 = sshll.u32 [#allocation7], 4
      %s44 = int_to_ptr.vmem [resolvable:$true] %s43
      %49 = dma.hbm_to_vmem [thread:$0]  %s2, 768, %s44, [#allocation6], 384, 384, 24
    $region13: #{tpu_custom_call.1} parent=1 // pred_fallthru
      _
    // Predicated region
    $region14: #{tpu_custom_call.1} parent=1 // pred_check
      _
    $region15: #{tpu_custom_call.1} parent=1 // pred_check_branch
      %51 = sbr.rel (0) target = $region17
    $region16: #{tpu_custom_call.1} parent=1 // pred_region
      %s53 = ssub.s32 768, 768
      %54 = vsyncadd [#allocation9], %s53
      %s55 = sshll.u32 [#allocation8], 4
      %s56 = int_to_ptr.vmem [resolvable:$true] %s55
      %61 = dma.hbm_to_vmem [thread:$0]  %s3, 768, %s56, [#allocation9], 384, 384, 24
    $region17: #{tpu_custom_call.1} parent=1 // pred_fallthru
      _
    // Predicated region
    $region18: #{tpu_custom_call.1} parent=1 // pred_check
      _
    $region19: #{tpu_custom_call.1} parent=1 // pred_check_branch
      %63 = sbr.rel (0) target = $region21
    $region20: #{tpu_custom_call.1} parent=1 // pred_region
      _
    $region21: #{tpu_custom_call.1} parent=1 // pred_fallthru
      _
    // Predicated region
    $region22: #{tpu_custom_call.1} parent=1 // pred_check
      _
    $region23: #{tpu_custom_call.1} parent=1 // pred_check_branch
      %65 = sbr.rel (0) target = $region25
    $region24: #{tpu_custom_call.1} parent=1 // pred_region
      %66 = dma.done [#allocation3], 256
    $region25: #{tpu_custom_call.1} parent=1 // pred_fallthru
      _
    // Predicated region
    $region26: #{tpu_custom_call.1} parent=1 // pred_check
      _
    $region27: #{tpu_custom_call.1} parent=1 // pred_check_branch
      %68 = sbr.rel (0) target = $region29
    $region28: #{tpu_custom_call.1} parent=1 // pred_region
      %69 = dma.done [#allocation6], 256
    $region29: #{tpu_custom_call.1} parent=1 // pred_fallthru
      _
    // Predicated region
    $region30: #{tpu_custom_call.1} parent=1 // pred_check
      _
    $region31: #{tpu_custom_call.1} parent=1 // pred_check_branch
      %71 = sbr.rel (0) target = $region33
    $region32: #{tpu_custom_call.1} parent=1 // pred_region
      %72 = dma.done [#allocation6], 768
    $region33: #{tpu_custom_call.1} parent=1 // pred_fallthru
      _
    // Predicated region
    $region34: #{tpu_custom_call.1} parent=1 // pred_check
      _
    $region35: #{tpu_custom_call.1} parent=1 // pred_check_branch
      %74 = sbr.rel (0) target = $region37
    $region36: #{tpu_custom_call.1} parent=1 // pred_region
      %75 = dma.done [#allocation9], 768
    $region37: #{tpu_custom_call.1} parent=1 // pred_fallthru
      _
    %v76 = vld [vmem:[#allocation2] sm:$0xff]
    %v77 = vld [vmem:[#allocation2 + $0x8] sm:$0xff]
    %v78 = vld [vmem:[#allocation5] sm:$0xff]
    %v79 = vld [vmem:[#allocation5 + $0x8] sm:$0xff]
    %v80 = vld [vmem:[#allocation7] sm:$0xff]
    %v81 = vld [vmem:[#allocation7 + $0x8] sm:$0xff]
    %v82 = vld [vmem:[#allocation7 + $0x10] sm:$0xff]
    %v83 = vld [vmem:[#allocation7 + $0x18] sm:$0xff]
    %v84 = vld [vmem:[#allocation7 + $0x20] sm:$0xff]
    %v85 = vld [vmem:[#allocation7 + $0x28] sm:$0xff]
    %v86 = vld [vmem:[#allocation8] sm:$0xff]
    %v87 = vld [vmem:[#allocation8 + $0x8] sm:$0xff]
    %v88 = vld [vmem:[#allocation8 + $0x10] sm:$0xff]
    %v89 = vld [vmem:[#allocation8 + $0x18] sm:$0xff]
    %v90 = vld [vmem:[#allocation8 + $0x20] sm:$0xff]
    %v91 = vld [vmem:[#allocation8 + $0x28] sm:$0xff]
    %vm92 = vcmask 130048
    %v94 = vsel %vm92, %v78, 0
    %v97 = vsel %vm92, %v79, 0
    %99 = vmatprep.subr.mxu0 0.0
    %100 = vmatpush1.msra.mxu0 0.0
    %101 = vmatprep.subr.mxu0 0.0
    %102 = vmatpush1.msra.mxu0 0.0
    %103 = vmatprep.subr.mxu0 0.0
    %104 = vmatpush1.msra.mxu0 0.0
    %105 = vmatprep.subr.mxu0 0.0
    %106 = vmatpush1.msra.mxu0 0.0
    %107 = vmatprep.subr.mxu0 0.0
    %108 = vmatpush1.msra.mxu0 0.0
    %109 = vmatprep.subr.mxu0 0.0
    %110 = vmatpush1.msra.mxu0 0.0
    %111 = vmatprep.subr.mxu0 0.0
    %112 = vmatpush1.msra.mxu0 0.0
    %113 = vmatprep.subr.mxu0 0.0
    %114 = vmatpush1.msra.mxu0 0.0
    %115 = vmatprep.subr.mxu0 0.0
    %116 = vmatpush1.msra.mxu0 0.0
    %117 = vmatprep.subr.mxu0 0.0
    %118 = vmatpush1.msra.mxu0 0.0
    %119 = vmatprep.subr.mxu0 0.0
    %120 = vmatpush1.msra.mxu0 0.0
    %121 = vmatprep.subr.mxu0 0.0
    %122 = vmatpush1.msra.mxu0 0.0
    %123 = vmatprep.subr.mxu0 0.0
    %124 = vmatpush1.msra.mxu0 0.0
    %125 = vmatprep.subr.mxu0 0.0
    %126 = vmatpush1.msra.mxu0 0.0
    %127 = vmatprep.subr.mxu0 %v90
    %128 = vmatpush1.msra.mxu0 %v89
    %129 = vmatprep.subr.mxu0 %v87
    %130 = vmatpush1.msra.mxu0 %v86
    %131 = vmatprep.subr.mxu0 0.0
    %132 = vmatpush2.msra.mxu0 0.0
    %133 = vmatprep.subr.mxu0 0.0
    %134 = vmatpush2.msra.mxu0 0.0
    %135 = vmatprep.subr.mxu0 0.0
    %136 = vmatpush2.msra.mxu0 0.0
    %137 = vmatprep.subr.mxu0 0.0
    %138 = vmatpush2.msra.mxu0 0.0
    %139 = vmatprep.subr.mxu0 0.0
    %140 = vmatpush2.msra.mxu0 0.0
    %141 = vmatprep.subr.mxu0 0.0
    %142 = vmatpush2.msra.mxu0 0.0
    %143 = vmatprep.subr.mxu0 0.0
    %144 = vmatpush2.msra.mxu0 0.0
    %145 = vmatprep.subr.mxu0 0.0
    %146 = vmatpush2.msra.mxu0 0.0
    %147 = vmatprep.subr.mxu0 0.0
    %148 = vmatpush2.msra.mxu0 0.0
    %149 = vmatprep.subr.mxu0 0.0
    %150 = vmatpush2.msra.mxu0 0.0
    %151 = vmatprep.subr.mxu0 0.0
    %152 = vmatpush2.msra.mxu0 0.0
    %153 = vmatprep.subr.mxu0 0.0
    %154 = vmatpush2.msra.mxu0 0.0
    %155 = vmatprep.subr.mxu0 0.0
    %156 = vmatpush2.msra.mxu0 0.0
    %157 = vmatprep.subr.mxu0 0.0
    %158 = vmatpush2.msra.mxu0 0.0
    %159 = vmatprep.subr.mxu0 0.0
    %160 = vmatpush2.msra.mxu0 0.0
    %161 = vmatprep.subr.mxu0 0.0
    %162 = vmatpush2.msra.mxu0 0.0
    %163 = vmatprep.mubr.f32.mxu0 0.0
    %164 = vmatmul.mubr.f32.gmra.mxu0 %v94
    %v165 = vpop.f32.mrf.mxu0
    %v166 = vadd.f32 0.0, %v165
    %v167 = vpop.f32.mrf.mxu0
    %v168 = vadd.f32 0.0, %v167
    %169 = vmatprep.mubr.f32.mxu0 0.0
    %170 = vmatmul.mubr.f32.gmra.mxu0 %v97
    %v171 = vpop.f32.mrf.mxu0
    %v172 = vadd.f32 0.0, %v171
    %v173 = vpop.f32.mrf.mxu0
    %v174 = vadd.f32 0.0, %v173
    %175 = vdwg.mxu0
    %176 = vmatprep.subr.mxu0 0.0
    %177 = vmatpush1.msra.mxu0 0.0
    %178 = vmatprep.subr.mxu0 0.0
    %179 = vmatpush1.msra.mxu0 0.0
    %180 = vmatprep.subr.mxu0 0.0
    %181 = vmatpush1.msra.mxu0 0.0
    %182 = vmatprep.subr.mxu0 0.0
    %183 = vmatpush1.msra.mxu0 0.0
    %184 = vmatprep.subr.mxu0 0.0
    %185 = vmatpush1.msra.mxu0 0.0
    %186 = vmatprep.subr.mxu0 0.0
    %187 = vmatpush1.msra.mxu0 0.0
    %188 = vmatprep.subr.mxu0 0.0
    %189 = vmatpush1.msra.mxu0 0.0
    %190 = vmatprep.subr.mxu0 0.0
    %191 = vmatpush1.msra.mxu0 0.0
    %192 = vmatprep.subr.mxu0 0.0
    %193 = vmatpush1.msra.mxu0 0.0
    %194 = vmatprep.subr.mxu0 0.0
    %195 = vmatpush1.msra.mxu0 0.0
    %196 = vmatprep.subr.mxu0 0.0
    %197 = vmatpush1.msra.mxu0 0.0
    %198 = vmatprep.subr.mxu0 0.0
    %199 = vmatpush1.msra.mxu0 0.0
    %200 = vmatprep.subr.mxu0 0.0
    %201 = vmatpush1.msra.mxu0 0.0
    %202 = vmatprep.subr.mxu0 0.0
    %203 = vmatpush1.msra.mxu0 0.0
    %204 = vmatprep.subr.mxu0 0.0
    %205 = vmatpush1.msra.mxu0 %v91
    %206 = vmatprep.subr.mxu0 0.0
    %207 = vmatpush1.msra.mxu0 %v88
    %208 = vmatprep.subr.mxu0 0.0
    %209 = vmatpush2.msra.mxu0 0.0
    %210 = vmatprep.subr.mxu0 0.0
    %211 = vmatpush2.msra.mxu0 0.0
    %212 = vmatprep.subr.mxu0 0.0
    %213 = vmatpush2.msra.mxu0 0.0
    %214 = vmatprep.subr.mxu0 0.0
    %215 = vmatpush2.msra.mxu0 0.0
    %216 = vmatprep.subr.mxu0 0.0
    %217 = vmatpush2.msra.mxu0 0.0
    %218 = vmatprep.subr.mxu0 0.0
    %219 = vmatpush2.msra.mxu0 0.0
    %220 = vmatprep.subr.mxu0 0.0
    %221 = vmatpush2.msra.mxu0 0.0
    %222 = vmatprep.subr.mxu0 0.0
    %223 = vmatpush2.msra.mxu0 0.0
    %224 = vmatprep.subr.mxu0 0.0
    %225 = vmatpush2.msra.mxu0 0.0
    %226 = vmatprep.subr.mxu0 0.0
    %227 = vmatpush2.msra.mxu0 0.0
    %228 = vmatprep.subr.mxu0 0.0
    %229 = vmatpush2.msra.mxu0 0.0
    %230 = vmatprep.subr.mxu0 0.0
    %231 = vmatpush2.msra.mxu0 0.0
    %232 = vmatprep.subr.mxu0 0.0
    %233 = vmatpush2.msra.mxu0 0.0
    %234 = vmatprep.subr.mxu0 0.0
    %235 = vmatpush2.msra.mxu0 0.0
    %236 = vmatprep.subr.mxu0 0.0
    %237 = vmatpush2.msra.mxu0 0.0
    %238 = vmatprep.subr.mxu0 0.0
    %239 = vmatpush2.msra.mxu0 0.0
    %240 = vmatprep.mubr.f32.mxu0 0.0
    %241 = vmatmul.mubr.f32.gmra.mxu0 %v94
    %v242 = vpop.f32.mrf.mxu0
    %v243 = vadd.f32 0.0, %v242
    %v244 = vpop.f32.mrf.mxu0
    %245 = vmatprep.mubr.f32.mxu0 0.0
    %246 = vmatmul.mubr.f32.gmra.mxu0 %v97
    %v247 = vpop.f32.mrf.mxu0
    %v248 = vadd.f32 0.0, %v247
    %v249 = vpop.f32.mrf.mxu0
    %250 = vdwg.mxu0
    %v252 = vsel %vm92, %v76, 0
    %v255 = vsel %vm92, %v77, 0
    %257 = vmatprep.subr.mxu0 0.0
    %258 = vmatpush1.msra.mxu0 0.0
    %259 = vmatprep.subr.mxu0 0.0
    %260 = vmatpush1.msra.mxu0 0.0
    %261 = vmatprep.subr.mxu0 0.0
    %262 = vmatpush1.msra.mxu0 0.0
    %263 = vmatprep.subr.mxu0 0.0
    %264 = vmatpush1.msra.mxu0 0.0
    %265 = vmatprep.subr.mxu0 0.0
    %266 = vmatpush1.msra.mxu0 0.0
    %267 = vmatprep.subr.mxu0 0.0
    %268 = vmatpush1.msra.mxu0 0.0
    %269 = vmatprep.subr.mxu0 0.0
    %270 = vmatpush1.msra.mxu0 0.0
    %271 = vmatprep.subr.mxu0 0.0
    %272 = vmatpush1.msra.mxu0 0.0
    %273 = vmatprep.subr.mxu0 0.0
    %274 = vmatpush1.msra.mxu0 0.0
    %275 = vmatprep.subr.mxu0 0.0
    %276 = vmatpush1.msra.mxu0 0.0
    %277 = vmatprep.subr.mxu0 0.0
    %278 = vmatpush1.msra.mxu0 0.0
    %279 = vmatprep.subr.mxu0 0.0
    %280 = vmatpush1.msra.mxu0 0.0
    %281 = vmatprep.subr.mxu0 0.0
    %282 = vmatpush1.msra.mxu0 0.0
    %283 = vmatprep.subr.mxu0 0.0
    %284 = vmatpush1.msra.mxu0 0.0
    %285 = vmatprep.subr.mxu0 %v84
    %286 = vmatpush1.msra.mxu0 %v83
    %287 = vmatprep.subr.mxu0 %v81
    %288 = vmatpush1.msra.mxu0 %v80
    %289 = vmatprep.subr.mxu0 0.0
    %290 = vmatpush2.msra.mxu0 0.0
    %291 = vmatprep.subr.mxu0 0.0
    %292 = vmatpush2.msra.mxu0 0.0
    %293 = vmatprep.subr.mxu0 0.0
    %294 = vmatpush2.msra.mxu0 0.0
    %295 = vmatprep.subr.mxu0 0.0
    %296 = vmatpush2.msra.mxu0 0.0
    %297 = vmatprep.subr.mxu0 0.0
    %298 = vmatpush2.msra.mxu0 0.0
    %299 = vmatprep.subr.mxu0 0.0
    %300 = vmatpush2.msra.mxu0 0.0
    %301 = vmatprep.subr.mxu0 0.0
    %302 = vmatpush2.msra.mxu0 0.0
    %303 = vmatprep.subr.mxu0 0.0
    %304 = vmatpush2.msra.mxu0 0.0
    %305 = vmatprep.subr.mxu0 0.0
    %306 = vmatpush2.msra.mxu0 0.0
    %307 = vmatprep.subr.mxu0 0.0
    %308 = vmatpush2.msra.mxu0 0.0
    %309 = vmatprep.subr.mxu0 0.0
    %310 = vmatpush2.msra.mxu0 0.0
    %311 = vmatprep.subr.mxu0 0.0
    %312 = vmatpush2.msra.mxu0 0.0
    %313 = vmatprep.subr.mxu0 0.0
    %314 = vmatpush2.msra.mxu0 0.0
    %315 = vmatprep.subr.mxu0 0.0
    %316 = vmatpush2.msra.mxu0 0.0
    %317 = vmatprep.subr.mxu0 0.0
    %318 = vmatpush2.msra.mxu0 0.0
    %319 = vmatprep.subr.mxu0 0.0
    %320 = vmatpush2.msra.mxu0 0.0
    %321 = vmatprep.mubr.f32.mxu0 0.0
    %322 = vmatmul.mubr.f32.gmra.mxu0 %v252
    %v323 = vpop.f32.mrf.mxu0
    %v324 = vadd.f32 %v166, %v323
    %v325 = vpop.f32.mrf.mxu0
    %v326 = vadd.f32 %v168, %v325
    %327 = vmatprep.mubr.f32.mxu0 0.0
    %328 = vmatmul.mubr.f32.gmra.mxu0 %v255
    %v329 = vpop.f32.mrf.mxu0
    %v330 = vadd.f32 %v172, %v329
    %v331 = vpop.f32.mrf.mxu0
    %v332 = vadd.f32 %v174, %v331
    %333 = vdwg.mxu0
    %334 = vmatprep.subr.mxu0 0.0
    %335 = vmatpush1.msra.mxu0 0.0
    %336 = vmatprep.subr.mxu0 0.0
    %337 = vmatpush1.msra.mxu0 0.0
    %338 = vmatprep.subr.mxu0 0.0
    %339 = vmatpush1.msra.mxu0 0.0
    %340 = vmatprep.subr.mxu0 0.0
    %341 = vmatpush1.msra.mxu0 0.0
    %342 = vmatprep.subr.mxu0 0.0
    %343 = vmatpush1.msra.mxu0 0.0
    %344 = vmatprep.subr.mxu0 0.0
    %345 = vmatpush1.msra.mxu0 0.0
    %346 = vmatprep.subr.mxu0 0.0
    %347 = vmatpush1.msra.mxu0 0.0
    %348 = vmatprep.subr.mxu0 0.0
    %349 = vmatpush1.msra.mxu0 0.0
    %350 = vmatprep.subr.mxu0 0.0
    %351 = vmatpush1.msra.mxu0 0.0
    %352 = vmatprep.subr.mxu0 0.0
    %353 = vmatpush1.msra.mxu0 0.0
    %354 = vmatprep.subr.mxu0 0.0
    %355 = vmatpush1.msra.mxu0 0.0
    %356 = vmatprep.subr.mxu0 0.0
    %357 = vmatpush1.msra.mxu0 0.0
    %358 = vmatprep.subr.mxu0 0.0
    %359 = vmatpush1.msra.mxu0 0.0
    %360 = vmatprep.subr.mxu0 0.0
    %361 = vmatpush1.msra.mxu0 0.0
    %362 = vmatprep.subr.mxu0 0.0
    %363 = vmatpush1.msra.mxu0 %v85
    %364 = vmatprep.subr.mxu0 0.0
    %365 = vmatpush1.msra.mxu0 %v82
    %366 = vmatprep.subr.mxu0 0.0
    %367 = vmatpush2.msra.mxu0 0.0
    %368 = vmatprep.subr.mxu0 0.0
    %369 = vmatpush2.msra.mxu0 0.0
    %370 = vmatprep.subr.mxu0 0.0
    %371 = vmatpush2.msra.mxu0 0.0
    %372 = vmatprep.subr.mxu0 0.0
    %373 = vmatpush2.msra.mxu0 0.0
    %374 = vmatprep.subr.mxu0 0.0
    %375 = vmatpush2.msra.mxu0 0.0
    %376 = vmatprep.subr.mxu0 0.0
    %377 = vmatpush2.msra.mxu0 0.0
    %378 = vmatprep.subr.mxu0 0.0
    %379 = vmatpush2.msra.mxu0 0.0
    %380 = vmatprep.subr.mxu0 0.0
    %381 = vmatpush2.msra.mxu0 0.0
    %382 = vmatprep.subr.mxu0 0.0
    %383 = vmatpush2.msra.mxu0 0.0
    %384 = vmatprep.subr.mxu0 0.0
    %385 = vmatpush2.msra.mxu0 0.0
    %386 = vmatprep.subr.mxu0 0.0
    %387 = vmatpush2.msra.mxu0 0.0
    %388 = vmatprep.subr.mxu0 0.0
    %389 = vmatpush2.msra.mxu0 0.0
    %390 = vmatprep.subr.mxu0 0.0
    %391 = vmatpush2.msra.mxu0 0.0
    %392 = vmatprep.subr.mxu0 0.0
    %393 = vmatpush2.msra.mxu0 0.0
    %394 = vmatprep.subr.mxu0 0.0
    %395 = vmatpush2.msra.mxu0 0.0
    %396 = vmatprep.subr.mxu0 0.0
    %397 = vmatpush2.msra.mxu0 0.0
    %398 = vmatprep.mubr.f32.mxu0 0.0
    %399 = vmatmul.mubr.f32.gmra.mxu0 %v252
    %v400 = vpop.f32.mrf.mxu0
    %v401 = vadd.f32 %v243, %v400
    %v402 = vpop.f32.mrf.mxu0
    %403 = vmatprep.mubr.f32.mxu0 0.0
    %404 = vmatmul.mubr.f32.gmra.mxu0 %v255
    %v405 = vpop.f32.mrf.mxu0
    %v406 = vadd.f32 %v248, %v405
    %v407 = vpop.f32.mrf.mxu0
    %408 = vdwg.mxu0
    %v409 = vld [vmem:[%s4] sm:$0x7]
    %v411 = vlaneseq
    %v412 = vshrl.u32 %v411, 7
    %v413 = vsub.s32 0, %v412
    %v414 = vrot.slane %v409, %v413
    %v415 = vlaneseq
    %v416 = vshrl.u32 %v415, 7
    %v417 = vsub.s32 1, %v416
    %v418 = vrot.slane %v409, %v417
    %v419 = vlaneseq
    %v420 = vshrl.u32 %v419, 7
    %v421 = vsub.s32 2, %v420
    %v422 = vrot.slane %v409, %v421
    %v426 = vadd.f32 %v324, %v414
    %v427 = vadd.f32 %v326, %v418
    %v428 = vadd.f32 %v401, %v422
    %v429 = vadd.f32 %v330, %v414
    %v430 = vadd.f32 %v332, %v418
    %v431 = vadd.f32 %v406, %v422
    %v432 = vxor.u32 %v427, 2147483648
    %v433 = vxor.u32 %v430, 2147483648
    %v434 = vmul.f32 %v432, 1.442695
    %v435 = vpow.pop %v434
    %v436 = vmul.f32 %v433, 1.442695
    %v437 = vpow.pop %v436
    %v438 = vadd.f32 %v435, 1.0
    %v439 = vadd.f32 %v437, 1.0
    %v440 = vrcp.pop %v438
    %v441 = vmul.f32 1.0, %v440
    %v442 = vrcp.pop %v439
    %v443 = vmul.f32 1.0, %v442
    %v444 = vmax.f32 %v426, 0.0
    %v445 = vmax.f32 %v429, 0.0
    %v446 = vmul.f32 %v444, %v441
    %v447 = vmul.f32 %v445, %v443
    %v448 = vsub.f32 1.0, %v441
    %v449 = vsub.f32 1.0, %v443
    %v450 = vmul.f32 %v448, %v428
    %v451 = vmul.f32 %v449, %v431
    %v452 = vadd.f32 %v446, %v450
    %v453 = vadd.f32 %v447, %v451
    %454 = vst [vmem:[#allocation10] sm:$0xff] %v452
    %455 = vst [vmem:[#allocation10 + $0x8] sm:$0xff] %v453
    // Predicated region
    $region38: #{tpu_custom_call.1} parent=1 // pred_check
      _
    $region39: #{tpu_custom_call.1} parent=1 // pred_check_branch
      %457 = sbr.rel (0) target = $region41
    $region40: #{tpu_custom_call.1} parent=1 // pred_region
      %s459 = ssub.s32 256, 256
      %460 = vsyncadd [#allocation4], %s459
      %s461 = sshll.u32 [#allocation10], 4
      %s462 = int_to_ptr.vmem [resolvable:$true] %s461
      %467 = dma.vmem_to_hbm [thread:$0]  %s462, 256, %s5, [#allocation4], 128, 128, 8
    $region41: #{tpu_custom_call.1} parent=1 // pred_fallthru
      _
    // Predicated region
    $region42: #{tpu_custom_call.1} parent=1 // pred_check
      _
    $region43: #{tpu_custom_call.1} parent=1 // pred_check_branch
      %469 = sbr.rel (0) target = $region45
    $region44: #{tpu_custom_call.1} parent=1 // pred_region
      %470 = dma.done [#allocation4], 256
    $region45: #{tpu_custom_call.1} parent=1 // pred_fallthru
      _
    %471 = vsyncpa [#allocation3], 1
    %472 = vsyncpa [#allocation6], 1
    %473 = vsyncpa [#allocation9], 1
    %474 = vsyncpa [#allocation4], 1

// kernel: tpu_custom_call.1
$region0: #{tpu_custom_call.1}
  #allocation0 [shape = 'u32[]', space=smem, size = 0x4, offset = 0x4, fixed_abs, tag = 'smem constant byte address 0x4 - core index']
  #allocation1 [shape = 'u32[144,128]{1,0:T(1,128)}', space=vmem, size = 0x12000, scoped, tag = 'internal scratch']
  %s0 = inlined_call_operand.hbm [shape: f32[16,16], index: 0, kind: input, shape index: {}]
  %s1 = inlined_call_operand.hbm [shape: f32[16,16], index: 1, kind: input, shape index: {}]
  %s2 = inlined_call_operand.hbm [shape: f32[16,384], index: 2, kind: input, shape index: {}]
  %s3 = inlined_call_operand.hbm [shape: f32[16,384], index: 3, kind: input, shape index: {}]
  %s4 = inlined_call_operand.vmem [shape: f32[1,384], index: 4, kind: input, shape index: {}]
  %s5 = inlined_call_operand.hbm [shape: f32[16,128], index: 5, kind: output, shape index: {}]
  %s6 = sld [smem:[#allocation0]]
  $region46: #{tpu_custom_call.1} parent=0
    _
  %s8 = ssub.s32 1, %s6
  %s9 = scalar_select 0, %s8, %s6
  $region1: #{tpu_custom_call.1} parent=0
    #allocation2 [shape = 'u8[8192]{0}', space=vmem, size = 0x2000, scoped, tag = 'input window, operand 0, single buffered']
    #allocation3 [shape = 's32[1]{0}', space=sflag, size = 0x4, scoped, tag = 'scoped memory for tpu_custom_call.1']
    #allocation4 [shape = 's32[1]{0}', space=sflag, size = 0x4, scoped, tag = 'scoped memory for tpu_custom_call.1']
    #allocation5 [shape = 'u8[8192]{0}', space=vmem, size = 0x2000, scoped, tag = 'input window, operand 1, single buffered']
    #allocation6 [shape = 's32[1]{0}', space=sflag, size = 0x4, scoped, tag = 'scoped memory for tpu_custom_call.1']
    #allocation7 [shape = 'u8[24576]{0}', space=vmem, size = 0x6000, scoped, tag = 'input window, operand 2, single buffered']
    #allocation8 [shape = 'u8[24576]{0}', space=vmem, size = 0x6000, scoped, tag = 'input window, operand 3, single buffered']
    #allocation9 [shape = 's32[1]{0}', space=sflag, size = 0x4, scoped, tag = 'scoped memory for tpu_custom_call.1']
    #allocation10 [shape = 'u8[8192]{0}', space=vmem, size = 0x2000, scoped, tag = 'output window, operand 0, single buffered']
    %10 = vsyncpa [#allocation3], 0
    %11 = vsyncpa [#allocation6], 0
    %12 = vsyncpa [#allocation9], 0
    %13 = vsyncpa [#allocation4], 0
    // Predicated region
    $region2: #{tpu_custom_call.1} parent=1 // pred_check
      _
    $region3: #{tpu_custom_call.1} parent=1 // pred_check_branch
      %15 = sbr.rel (0) target = $region5
    $region4: #{tpu_custom_call.1} parent=1 // pred_region
      %s17 = ssub.s32 256, 256
      %18 = vsyncadd [#allocation3], %s17
      %s19 = sshll.u32 [#allocation2], 4
      %s20 = int_to_ptr.vmem [resolvable:$true] %s19
      %25 = dma.hbm_to_vmem [thread:$0]  %s0, 256, %s20, [#allocation3], 128, 128, 8
    $region5: #{tpu_custom_call.1} parent=1 // pred_fallthru
      _
    // Predicated region
    $region6: #{tpu_custom_call.1} parent=1 // pred_check
      _
    $region7: #{tpu_custom_call.1} parent=1 // pred_check_branch
      %27 = sbr.rel (0) target = $region9
    $region8: #{tpu_custom_call.1} parent=1 // pred_region
      %s29 = ssub.s32 256, 256
      %30 = vsyncadd [#allocation6], %s29
      %s31 = sshll.u32 [#allocation5], 4
      %s32 = int_to_ptr.vmem [resolvable:$true] %s31
      %37 = dma.hbm_to_vmem [thread:$0]  %s1, 256, %s32, [#allocation6], 128, 128, 8
    $region9: #{tpu_custom_call.1} parent=1 // pred_fallthru
      _
    // Predicated region
    $region10: #{tpu_custom_call.1} parent=1 // pred_check
      _
    $region11: #{tpu_custom_call.1} parent=1 // pred_check_branch
      %39 = sbr.rel (0) target = $region13
    $region12: #{tpu_custom_call.1} parent=1 // pred_region
      %s41 = ssub.s32 768, 768
      %42 = vsyncadd [#allocation6], %s41
      %s43 = sshll.u32 [#allocation7], 4
      %s44 = int_to_ptr.vmem [resolvable:$true] %s43
      %49 = dma.hbm_to_vmem [thread:$0]  %s2, 768, %s44, [#allocation6], 384, 384, 24
    $region13: #{tpu_custom_call.1} parent=1 // pred_fallthru
      _
    // Predicated region
    $region14: #{tpu_custom_call.1} parent=1 // pred_check
      _
    $region15: #{tpu_custom_call.1} parent=1 // pred_check_branch
      %51 = sbr.rel (0) target = $region17
    $region16: #{tpu_custom_call.1} parent=1 // pred_region
      %s53 = ssub.s32 768, 768
      %54 = vsyncadd [#allocation9], %s53
      %s55 = sshll.u32 [#allocation8], 4
      %s56 = int_to_ptr.vmem [resolvable:$true] %s55
      %61 = dma.hbm_to_vmem [thread:$0]  %s3, 768, %s56, [#allocation9], 384, 384, 24
    $region17: #{tpu_custom_call.1} parent=1 // pred_fallthru
      _
    // Predicated region
    $region18: #{tpu_custom_call.1} parent=1 // pred_check
      _
    $region19: #{tpu_custom_call.1} parent=1 // pred_check_branch
      %63 = sbr.rel (0) target = $region21
    $region20: #{tpu_custom_call.1} parent=1 // pred_region
      _
    $region21: #{tpu_custom_call.1} parent=1 // pred_fallthru
      _
    // Predicated region
    $region22: #{tpu_custom_call.1} parent=1 // pred_check
      _
    $region23: #{tpu_custom_call.1} parent=1 // pred_check_branch
      %65 = sbr.rel (0) target = $region25
    $region24: #{tpu_custom_call.1} parent=1 // pred_region
      %66 = dma.done [#allocation3], 256
    $region25: #{tpu_custom_call.1} parent=1 // pred_fallthru
      _
    // Predicated region
    $region26: #{tpu_custom_call.1} parent=1 // pred_check
      _
    $region27: #{tpu_custom_call.1} parent=1 // pred_check_branch
      %68 = sbr.rel (0) target = $region29
    $region28: #{tpu_custom_call.1} parent=1 // pred_region
      %69 = dma.done [#allocation6], 256
    $region29: #{tpu_custom_call.1} parent=1 // pred_fallthru
      _
    // Predicated region
    $region30: #{tpu_custom_call.1} parent=1 // pred_check
      _
    $region31: #{tpu_custom_call.1} parent=1 // pred_check_branch
      %71 = sbr.rel (0) target = $region33
    $region32: #{tpu_custom_call.1} parent=1 // pred_region
      %72 = dma.done [#allocation6], 768
    $region33: #{tpu_custom_call.1} parent=1 // pred_fallthru
      _
    // Predicated region
    $region34: #{tpu_custom_call.1} parent=1 // pred_check
      _
    $region35: #{tpu_custom_call.1} parent=1 // pred_check_branch
      %74 = sbr.rel (0) target = $region37
    $region36: #{tpu_custom_call.1} parent=1 // pred_region
      %75 = dma.done [#allocation9], 768
    $region37: #{tpu_custom_call.1} parent=1 // pred_fallthru
      _
    %v76 = vld [vmem:[#allocation2] sm:$0xff]
    %v77 = vld [vmem:[#allocation2 + $0x8] sm:$0xff]
    %v78 = vld [vmem:[#allocation5] sm:$0xff]
    %v79 = vld [vmem:[#allocation5 + $0x8] sm:$0xff]
    %v80 = vld [vmem:[#allocation7] sm:$0xff]
    %v81 = vld [vmem:[#allocation7 + $0x8] sm:$0xff]
    %v82 = vld [vmem:[#allocation7 + $0x10] sm:$0xff]
    %v83 = vld [vmem:[#allocation7 + $0x18] sm:$0xff]
    %v84 = vld [vmem:[#allocation7 + $0x20] sm:$0xff]
    %v85 = vld [vmem:[#allocation7 + $0x28] sm:$0xff]
    %v86 = vld [vmem:[#allocation8] sm:$0xff]
    %v87 = vld [vmem:[#allocation8 + $0x8] sm:$0xff]
    %v88 = vld [vmem:[#allocation8 + $0x10] sm:$0xff]
    %v89 = vld [vmem:[#allocation8 + $0x18] sm:$0xff]
    %v90 = vld [vmem:[#allocation8 + $0x20] sm:$0xff]
    %v91 = vld [vmem:[#allocation8 + $0x28] sm:$0xff]
    %vm92 = vcmask 130048
    %v94 = vsel %vm92, %v78, 0
    %v97 = vsel %vm92, %v79, 0
    %99 = vmatprep.subr.mxu0 0.0
    %100 = vmatpush1.msra.mxu0 0.0
    %101 = vmatprep.subr.mxu0 0.0
    %102 = vmatpush1.msra.mxu0 0.0
    %103 = vmatprep.subr.mxu0 0.0
    %104 = vmatpush1.msra.mxu0 0.0
    %105 = vmatprep.subr.mxu0 0.0
    %106 = vmatpush1.msra.mxu0 0.0
    %107 = vmatprep.subr.mxu0 0.0
    %108 = vmatpush1.msra.mxu0 0.0
    %109 = vmatprep.subr.mxu0 0.0
    %110 = vmatpush1.msra.mxu0 0.0
    %111 = vmatprep.subr.mxu0 0.0
    %112 = vmatpush1.msra.mxu0 0.0
    %113 = vmatprep.subr.mxu0 0.0
    %114 = vmatpush1.msra.mxu0 0.0
    %115 = vmatprep.subr.mxu0 0.0
    %116 = vmatpush1.msra.mxu0 0.0
    %117 = vmatprep.subr.mxu0 0.0
    %118 = vmatpush1.msra.mxu0 0.0
    %119 = vmatprep.subr.mxu0 0.0
    %120 = vmatpush1.msra.mxu0 0.0
    %121 = vmatprep.subr.mxu0 0.0
    %122 = vmatpush1.msra.mxu0 0.0
    %123 = vmatprep.subr.mxu0 0.0
    %124 = vmatpush1.msra.mxu0 0.0
    %125 = vmatprep.subr.mxu0 0.0
    %126 = vmatpush1.msra.mxu0 0.0
    %127 = vmatprep.subr.mxu0 %v90
    %128 = vmatpush1.msra.mxu0 %v89
    %129 = vmatprep.subr.mxu0 %v87
    %130 = vmatpush1.msra.mxu0 %v86
    %131 = vmatprep.subr.mxu0 0.0
    %132 = vmatpush2.msra.mxu0 0.0
    %133 = vmatprep.subr.mxu0 0.0
    %134 = vmatpush2.msra.mxu0 0.0
    %135 = vmatprep.subr.mxu0 0.0
    %136 = vmatpush2.msra.mxu0 0.0
    %137 = vmatprep.subr.mxu0 0.0
    %138 = vmatpush2.msra.mxu0 0.0
    %139 = vmatprep.subr.mxu0 0.0
    %140 = vmatpush2.msra.mxu0 0.0
    %141 = vmatprep.subr.mxu0 0.0
    %142 = vmatpush2.msra.mxu0 0.0
    %143 = vmatprep.subr.mxu0 0.0
    %144 = vmatpush2.msra.mxu0 0.0
    %145 = vmatprep.subr.mxu0 0.0
    %146 = vmatpush2.msra.mxu0 0.0
    %147 = vmatprep.subr.mxu0 0.0
    %148 = vmatpush2.msra.mxu0 0.0
    %149 = vmatprep.subr.mxu0 0.0
    %150 = vmatpush2.msra.mxu0 0.0
    %151 = vmatprep.subr.mxu0 0.0
    %152 = vmatpush2.msra.mxu0 0.0
    %153 = vmatprep.subr.mxu0 0.0
    %154 = vmatpush2.msra.mxu0 0.0
    %155 = vmatprep.subr.mxu0 0.0
    %156 = vmatpush2.msra.mxu0 0.0
    %157 = vmatprep.subr.mxu0 0.0
    %158 = vmatpush2.msra.mxu0 0.0
    %159 = vmatprep.subr.mxu0 0.0
    %160 = vmatpush2.msra.mxu0 0.0
    %161 = vmatprep.subr.mxu0 0.0
    %162 = vmatpush2.msra.mxu0 0.0
    %163 = vmatprep.mubr.f32.mxu0 0.0
    %164 = vmatmul.mubr.f32.gmra.mxu0 %v94
    %v165 = vpop.f32.mrf.mxu0
    %v166 = vadd.f32 0.0, %v165
    %v167 = vpop.f32.mrf.mxu0
    %v168 = vadd.f32 0.0, %v167
    %169 = vmatprep.mubr.f32.mxu0 0.0
    %170 = vmatmul.mubr.f32.gmra.mxu0 %v97
    %v171 = vpop.f32.mrf.mxu0
    %v172 = vadd.f32 0.0, %v171
    %v173 = vpop.f32.mrf.mxu0
    %v174 = vadd.f32 0.0, %v173
    %175 = vdwg.mxu0
    %176 = vmatprep.subr.mxu0 0.0
    %177 = vmatpush1.msra.mxu0 0.0
    %178 = vmatprep.subr.mxu0 0.0
    %179 = vmatpush1.msra.mxu0 0.0
    %180 = vmatprep.subr.mxu0 0.0
    %181 = vmatpush1.msra.mxu0 0.0
    %182 = vmatprep.subr.mxu0 0.0
    %183 = vmatpush1.msra.mxu0 0.0
    %184 = vmatprep.subr.mxu0 0.0
    %185 = vmatpush1.msra.mxu0 0.0
    %186 = vmatprep.subr.mxu0 0.0
    %187 = vmatpush1.msra.mxu0 0.0
    %188 = vmatprep.subr.mxu0 0.0
    %189 = vmatpush1.msra.mxu0 0.0
    %190 = vmatprep.subr.mxu0 0.0
    %191 = vmatpush1.msra.mxu0 0.0
    %192 = vmatprep.subr.mxu0 0.0
    %193 = vmatpush1.msra.mxu0 0.0
    %194 = vmatprep.subr.mxu0 0.0
    %195 = vmatpush1.msra.mxu0 0.0
    %196 = vmatprep.subr.mxu0 0.0
    %197 = vmatpush1.msra.mxu0 0.0
    %198 = vmatprep.subr.mxu0 0.0
    %199 = vmatpush1.msra.mxu0 0.0
    %200 = vmatprep.subr.mxu0 0.0
    %201 = vmatpush1.msra.mxu0 0.0
    %202 = vmatprep.subr.mxu0 0.0
    %203 = vmatpush1.msra.mxu0 0.0
    %204 = vmatprep.subr.mxu0 0.0
    %205 = vmatpush1.msra.mxu0 %v91
    %206 = vmatprep.subr.mxu0 0.0
    %207 = vmatpush1.msra.mxu0 %v88
    %208 = vmatprep.subr.mxu0 0.0
    %209 = vmatpush2.msra.mxu0 0.0
    %210 = vmatprep.subr.mxu0 0.0
    %211 = vmatpush2.msra.mxu0 0.0
    %212 = vmatprep.subr.mxu0 0.0
    %213 = vmatpush2.msra.mxu0 0.0
    %214 = vmatprep.subr.mxu0 0.0
    %215 = vmatpush2.msra.mxu0 0.0
    %216 = vmatprep.subr.mxu0 0.0
    %217 = vmatpush2.msra.mxu0 0.0
    %218 = vmatprep.subr.mxu0 0.0
    %219 = vmatpush2.msra.mxu0 0.0
    %220 = vmatprep.subr.mxu0 0.0
    %221 = vmatpush2.msra.mxu0 0.0
    %222 = vmatprep.subr.mxu0 0.0
    %223 = vmatpush2.msra.mxu0 0.0
    %224 = vmatprep.subr.mxu0 0.0
    %225 = vmatpush2.msra.mxu0 0.0
    %226 = vmatprep.subr.mxu0 0.0
    %227 = vmatpush2.msra.mxu0 0.0
    %228 = vmatprep.subr.mxu0 0.0
    %229 = vmatpush2.msra.mxu0 0.0
    %230 = vmatprep.subr.mxu0 0.0
    %231 = vmatpush2.msra.mxu0 0.0
    %232 = vmatprep.subr.mxu0 0.0
    %233 = vmatpush2.msra.mxu0 0.0
    %234 = vmatprep.subr.mxu0 0.0
    %235 = vmatpush2.msra.mxu0 0.0
    %236 = vmatprep.subr.mxu0 0.0
    %237 = vmatpush2.msra.mxu0 0.0
    %238 = vmatprep.subr.mxu0 0.0
    %239 = vmatpush2.msra.mxu0 0.0
    %240 = vmatprep.mubr.f32.mxu0 0.0
    %241 = vmatmul.mubr.f32.gmra.mxu0 %v94
    %v242 = vpop.f32.mrf.mxu0
    %v243 = vadd.f32 0.0, %v242
    %v244 = vpop.f32.mrf.mxu0
    %245 = vmatprep.mubr.f32.mxu0 0.0
    %246 = vmatmul.mubr.f32.gmra.mxu0 %v97
    %v247 = vpop.f32.mrf.mxu0
    %v248 = vadd.f32 0.0, %v247
    %v249 = vpop.f32.mrf.mxu0
    %250 = vdwg.mxu0
    %v252 = vsel %vm92, %v76, 0
    %v255 = vsel %vm92, %v77, 0
    %257 = vmatprep.subr.mxu0 0.0
    %258 = vmatpush1.msra.mxu0 0.0
    %259 = vmatprep.subr.mxu0 0.0
    %260 = vmatpush1.msra.mxu0 0.0
    %261 = vmatprep.subr.mxu0 0.0
    %262 = vmatpush1.msra.mxu0 0.0
    %263 = vmatprep.subr.mxu0 0.0
    %264 = vmatpush1.msra.mxu0 0.0
    %265 = vmatprep.subr.mxu0 0.0
    %266 = vmatpush1.msra.mxu0 0.0
    %267 = vmatprep.subr.mxu0 0.0
    %268 = vmatpush1.msra.mxu0 0.0
    %269 = vmatprep.subr.mxu0 0.0
    %270 = vmatpush1.msra.mxu0 0.0
    %271 = vmatprep.subr.mxu0 0.0
    %272 = vmatpush1.msra.mxu0 0.0
    %273 = vmatprep.subr.mxu0 0.0
    %274 = vmatpush1.msra.mxu0 0.0
    %275 = vmatprep.subr.mxu0 0.0
    %276 = vmatpush1.msra.mxu0 0.0
    %277 = vmatprep.subr.mxu0 0.0
    %278 = vmatpush1.msra.mxu0 0.0
    %279 = vmatprep.subr.mxu0 0.0
    %280 = vmatpush1.msra.mxu0 0.0
    %281 = vmatprep.subr.mxu0 0.0
    %282 = vmatpush1.msra.mxu0 0.0
    %283 = vmatprep.subr.mxu0 0.0
    %284 = vmatpush1.msra.mxu0 0.0
    %285 = vmatprep.subr.mxu0 %v84
    %286 = vmatpush1.msra.mxu0 %v83
    %287 = vmatprep.subr.mxu0 %v81
    %288 = vmatpush1.msra.mxu0 %v80
    %289 = vmatprep.subr.mxu0 0.0
    %290 = vmatpush2.msra.mxu0 0.0
    %291 = vmatprep.subr.mxu0 0.0
    %292 = vmatpush2.msra.mxu0 0.0
    %293 = vmatprep.subr.mxu0 0.0
    %294 = vmatpush2.msra.mxu0 0.0
    %295 = vmatprep.subr.mxu0 0.0
    %296 = vmatpush2.msra.mxu0 0.0
    %297 = vmatprep.subr.mxu0 0.0
    %298 = vmatpush2.msra.mxu0 0.0
    %299 = vmatprep.subr.mxu0 0.0
    %300 = vmatpush2.msra.mxu0 0.0
    %301 = vmatprep.subr.mxu0 0.0
    %302 = vmatpush2.msra.mxu0 0.0
    %303 = vmatprep.subr.mxu0 0.0
    %304 = vmatpush2.msra.mxu0 0.0
    %305 = vmatprep.subr.mxu0 0.0
    %306 = vmatpush2.msra.mxu0 0.0
    %307 = vmatprep.subr.mxu0 0.0
    %308 = vmatpush2.msra.mxu0 0.0
    %309 = vmatprep.subr.mxu0 0.0
    %310 = vmatpush2.msra.mxu0 0.0
    %311 = vmatprep.subr.mxu0 0.0
    %312 = vmatpush2.msra.mxu0 0.0
    %313 = vmatprep.subr.mxu0 0.0
    %314 = vmatpush2.msra.mxu0 0.0
    %315 = vmatprep.subr.mxu0 0.0
    %316 = vmatpush2.msra.mxu0 0.0
    %317 = vmatprep.subr.mxu0 0.0
    %318 = vmatpush2.msra.mxu0 0.0
    %319 = vmatprep.subr.mxu0 0.0
    %320 = vmatpush2.msra.mxu0 0.0
    %321 = vmatprep.mubr.f32.mxu0 0.0
    %322 = vmatmul.mubr.f32.gmra.mxu0 %v252
    %v323 = vpop.f32.mrf.mxu0
    %v324 = vadd.f32 %v166, %v323
    %v325 = vpop.f32.mrf.mxu0
    %v326 = vadd.f32 %v168, %v325
    %327 = vmatprep.mubr.f32.mxu0 0.0
    %328 = vmatmul.mubr.f32.gmra.mxu0 %v255
    %v329 = vpop.f32.mrf.mxu0
    %v330 = vadd.f32 %v172, %v329
    %v331 = vpop.f32.mrf.mxu0
    %v332 = vadd.f32 %v174, %v331
    %333 = vdwg.mxu0
    %334 = vmatprep.subr.mxu0 0.0
    %335 = vmatpush1.msra.mxu0 0.0
    %336 = vmatprep.subr.mxu0 0.0
    %337 = vmatpush1.msra.mxu0 0.0
    %338 = vmatprep.subr.mxu0 0.0
    %339 = vmatpush1.msra.mxu0 0.0
    %340 = vmatprep.subr.mxu0 0.0
    %341 = vmatpush1.msra.mxu0 0.0
    %342 = vmatprep.subr.mxu0 0.0
    %343 = vmatpush1.msra.mxu0 0.0
    %344 = vmatprep.subr.mxu0 0.0
    %345 = vmatpush1.msra.mxu0 0.0
    %346 = vmatprep.subr.mxu0 0.0
    %347 = vmatpush1.msra.mxu0 0.0
    %348 = vmatprep.subr.mxu0 0.0
    %349 = vmatpush1.msra.mxu0 0.0
    %350 = vmatprep.subr.mxu0 0.0
    %351 = vmatpush1.msra.mxu0 0.0
    %352 = vmatprep.subr.mxu0 0.0
    %353 = vmatpush1.msra.mxu0 0.0
    %354 = vmatprep.subr.mxu0 0.0
    %355 = vmatpush1.msra.mxu0 0.0
    %356 = vmatprep.subr.mxu0 0.0
    %357 = vmatpush1.msra.mxu0 0.0
    %358 = vmatprep.subr.mxu0 0.0
    %359 = vmatpush1.msra.mxu0 0.0
    %360 = vmatprep.subr.mxu0 0.0
    %361 = vmatpush1.msra.mxu0 0.0
    %362 = vmatprep.subr.mxu0 0.0
    %363 = vmatpush1.msra.mxu0 %v85
    %364 = vmatprep.subr.mxu0 0.0
    %365 = vmatpush1.msra.mxu0 %v82
    %366 = vmatprep.subr.mxu0 0.0
    %367 = vmatpush2.msra.mxu0 0.0
    %368 = vmatprep.subr.mxu0 0.0
    %369 = vmatpush2.msra.mxu0 0.0
    %370 = vmatprep.subr.mxu0 0.0
    %371 = vmatpush2.msra.mxu0 0.0
    %372 = vmatprep.subr.mxu0 0.0
    %373 = vmatpush2.msra.mxu0 0.0
    %374 = vmatprep.subr.mxu0 0.0
    %375 = vmatpush2.msra.mxu0 0.0
    %376 = vmatprep.subr.mxu0 0.0
    %377 = vmatpush2.msra.mxu0 0.0
    %378 = vmatprep.subr.mxu0 0.0
    %379 = vmatpush2.msra.mxu0 0.0
    %380 = vmatprep.subr.mxu0 0.0
    %381 = vmatpush2.msra.mxu0 0.0
    %382 = vmatprep.subr.mxu0 0.0
    %383 = vmatpush2.msra.mxu0 0.0
    %384 = vmatprep.subr.mxu0 0.0
    %385 = vmatpush2.msra.mxu0 0.0
    %386 = vmatprep.subr.mxu0 0.0
    %387 = vmatpush2.msra.mxu0 0.0
    %388 = vmatprep.subr.mxu0 0.0
    %389 = vmatpush2.msra.mxu0 0.0
    %390 = vmatprep.subr.mxu0 0.0
    %391 = vmatpush2.msra.mxu0 0.0
    %392 = vmatprep.subr.mxu0 0.0
    %393 = vmatpush2.msra.mxu0 0.0
    %394 = vmatprep.subr.mxu0 0.0
    %395 = vmatpush2.msra.mxu0 0.0
    %396 = vmatprep.subr.mxu0 0.0
    %397 = vmatpush2.msra.mxu0 0.0
    %398 = vmatprep.mubr.f32.mxu0 0.0
    %399 = vmatmul.mubr.f32.gmra.mxu0 %v252
    %v400 = vpop.f32.mrf.mxu0
    %v401 = vadd.f32 %v243, %v400
    %v402 = vpop.f32.mrf.mxu0
    %403 = vmatprep.mubr.f32.mxu0 0.0
    %404 = vmatmul.mubr.f32.gmra.mxu0 %v255
    %v405 = vpop.f32.mrf.mxu0
    %v406 = vadd.f32 %v248, %v405
    %v407 = vpop.f32.mrf.mxu0
    %408 = vdwg.mxu0
    %v409 = vld [vmem:[%s4] sm:$0x7]
    %v411 = vlaneseq
    %v412 = vshrl.u32 %v411, 7
    %v413 = vsub.s32 0, %v412
    %v414 = vrot.slane %v409, %v413
    %v415 = vlaneseq
    %v416 = vshrl.u32 %v415, 7
    %v417 = vsub.s32 1, %v416
    %v418 = vrot.slane %v409, %v417
    %v419 = vlaneseq
    %v420 = vshrl.u32 %v419, 7
    %v421 = vsub.s32 2, %v420
    %v422 = vrot.slane %v409, %v421
    %v426 = vadd.f32 %v324, %v414
    %v427 = vadd.f32 %v326, %v418
    %v428 = vadd.f32 %v401, %v422
    %v429 = vadd.f32 %v330, %v414
    %v430 = vadd.f32 %v332, %v418
    %v431 = vadd.f32 %v406, %v422
    %v432 = vxor.u32 %v427, 2147483648
    %v433 = vxor.u32 %v430, 2147483648
    %v434 = vmul.f32 %v432, 1.442695
    %v435 = vpow.pop %v434
    %v436 = vmul.f32 %v433, 1.442695
    %v437 = vpow.pop %v436
    %v438 = vadd.f32 %v435, 1.0
    %v439 = vadd.f32 %v437, 1.0
    %v440 = vrcp.pop %v438
    %v441 = vmul.f32 1.0, %v440
    %v442 = vrcp.pop %v439
    %v443 = vmul.f32 1.0, %v442
    %v444 = vmax.f32 %v426, 0.0
    %v445 = vmax.f32 %v429, 0.0
    %v446 = vmul.f32 %v444, %v441
    %v447 = vmul.f32 %v445, %v443
    %v448 = vsub.f32 1.0, %v441
    %v449 = vsub.f32 1.0, %v443
    %v450 = vmul.f32 %v448, %v428
    %v451 = vmul.f32 %v449, %v431
    %v452 = vadd.f32 %v446, %v450
    %v453 = vadd.f32 %v447, %v451
    %454 = vst [vmem:[#allocation10] sm:$0xff] %v452
    %455 = vst [vmem:[#allocation10 + $0x8] sm:$0xff] %v453
    // Predicated region
    $region38: #{tpu_custom_call.1} parent=1 // pred_check
      _
    $region39: #{tpu_custom_call.1} parent=1 // pred_check_branch
      %457 = sbr.rel (0) target = $region41
    $region40: #{tpu_custom_call.1} parent=1 // pred_region
      %s459 = ssub.s32 256, 256
      %460 = vsyncadd [#allocation4], %s459
      %s461 = sshll.u32 [#allocation10], 4
      %s462 = int_to_ptr.vmem [resolvable:$true] %s461
      %467 = dma.vmem_to_hbm [thread:$0]  %s462, 256, %s5, [#allocation4], 128, 128, 8
    $region41: #{tpu_custom_call.1} parent=1 // pred_fallthru
      _
    // Predicated region
    $region42: #{tpu_custom_call.1} parent=1 // pred_check
      _
    $region43: #{tpu_custom_call.1} parent=1 // pred_check_branch
      %469 = sbr.rel (0) target = $region45
    $region44: #{tpu_custom_call.1} parent=1 // pred_region
      %470 = dma.done [#allocation4], 256
    $region45: #{tpu_custom_call.1} parent=1 // pred_fallthru
      _
    %471 = vsyncpa [#allocation3], 1
    %472 = vsyncpa [#allocation6], 1
    %473 = vsyncpa [#allocation9], 1
    %474 = vsyncpa [#allocation4], 1

</llo_original>
